<compile_context>
chip_gen: v5e
topology: v5e:2x2
jax: 0.10.0
libtpu: 0.0.40
codegen_flags: <defaults>
</compile_context>

<pallas_src>
import jax
import jax.numpy as jnp
from jax.experimental import pallas as pl
from jax.experimental.pallas import tpu as pltpu


def _embed_kernel(x_ref, scale_ref, shift_ref, w1t_ref, w2t_ref, o_ref):
    # x_ref:     (C, NT)    one batch element, channels-first, NT = J*T
    # scale_ref: (C, NT)    BN (eval) scale, constant across batch (resident)
    # shift_ref: (C, NT)    BN (eval) shift, constant across batch (resident)
    # w1t_ref:   (64, C)    first 1x1 conv weight, transposed (resident)
    # w2t_ref:   (128, 64)  second 1x1 conv weight, transposed (resident)
    # o_ref:     (128, NT)

    # BatchNorm1d (eval mode) folded into an elementwise affine (VPU).
    xn = x_ref[...] * scale_ref[...] + shift_ref[...]                  # (C, NT)

    w1t = w1t_ref[...]                                                 # (64, C)
    c = xn.shape[0]

    if c < 8:
        # First 1x1 conv (C -> 64), tiny K: unrolled VPU broadcast-FMAs instead of a
        # K=C MXU matmul (which would pad K to the full systolic depth).
        h = w1t[:, 0:1] * xn[0:1, :]                                   # (64,1)*(1,NT)->(64,NT)
        for ci in range(1, c):                                         # static unroll, C tiny
            h = h + w1t[:, ci:ci + 1] * xn[ci:ci + 1, :]
    else:
        # Generic path: large enough K to justify the MXU.
        h = jnp.dot(w1t, xn, preferred_element_type=jnp.float32)       # (64, NT)
    h = jnp.maximum(h, 0.0)                                            # ReLU

    # Second 1x1 conv (64 -> 128) on the MXU, f32 accumulation, then ReLU.
    o = jnp.dot(w2t_ref[...], h, preferred_element_type=jnp.float32)   # (128, NT)
    o_ref[...] = jnp.maximum(o, 0.0).astype(o_ref.dtype)


@jax.jit
def embed_forward(x_nchw, bn_scale_cj, bn_shift_cj, w1, w2):
    """x_nchw: (bs, C, J, T) f32.  bn_*_cj: (C, J).  w1: (C, 64).  w2: (64, D1).

    Returns (bs, D1, J, T) f32, matching the PyTorch module (BN in eval mode).
    """
    bs, c, j, t = x_nchw.shape
    hid = w1.shape[1]
    d1 = w2.shape[1]
    nt = j * t

    # Free reshapes / tiny constants only -- no big wrapper-side data movement.
    x_rows = x_nchw.reshape(bs, c, nt)                                         # (bs, C, NT)
    scale_row = jnp.broadcast_to(bn_scale_cj[:, :, None], (c, j, t)).reshape(c, nt)
    shift_row = jnp.broadcast_to(bn_shift_cj[:, :, None], (c, j, t)).reshape(c, nt)
    w1t = w1.T                                                                 # (hid, C)
    w2t = w2.T                                                                 # (D1, hid)

    out = pl.pallas_call(
        _embed_kernel,
        out_shape=jax.ShapeDtypeStruct((bs, d1, nt), jnp.float32),
        grid_spec=pltpu.PrefetchScalarGridSpec(
            num_scalar_prefetch=0,
            grid=(bs,),
            in_specs=[
                pl.BlockSpec((None, c, nt), lambda b: (b, 0, 0)),    # x: one batch plane
                pl.BlockSpec((c, nt), lambda b: (0, 0)),             # BN scale (resident)
                pl.BlockSpec((c, nt), lambda b: (0, 0)),             # BN shift (resident)
                pl.BlockSpec((hid, c), lambda b: (0, 0)),            # w1^T (resident)
                pl.BlockSpec((d1, hid), lambda b: (0, 0)),           # w2^T (resident)
            ],
            out_specs=pl.BlockSpec((None, d1, nt), lambda b: (b, 0, 0)),
        ),
        compiler_params=pltpu.CompilerParams(
            dimension_semantics=("parallel",),    # shards batch across TCs on v7x
        ),
    )(x_rows, scale_row, shift_row, w1t, w2t)

    return out.reshape(bs, d1, j, t)   # free reshape back to NCHW


def reference_forward(x_nchw, bn_scale_cj, bn_shift_cj, w1, w2):
    """Plain-JAX reference mirroring the PyTorch module (BN in eval mode)."""
    xn = x_nchw * bn_scale_cj[None, :, :, None] + bn_shift_cj[None, :, :, None]
    h = jnp.maximum(jnp.einsum("bcjt,cd->bdjt", xn, w1), 0.0)
    o = jnp.maximum(jnp.einsum("bdjt,de->bejt", h, w2), 0.0)
    return o


if __name__ == "__main__":
    # Small shapes consistent with the module: num_joints is fixed to 25 by norm_data(dim).
    bs, dim, num_joints, step = 2, 3, 25, 8
    hidden, dim1 = 64, 128
    eps = 1e-5

    key = jax.random.PRNGKey(0)
    kx, kw1, kw2, kg, kb, km, kv = jax.random.split(key, 7)

    x = jax.random.normal(kx, (bs, dim, num_joints, step), dtype=jnp.float32)

    # Conv2d 1x1 weights (bias=False): torch shape (out, in, 1, 1) -> stored here as (in, out).
    w1 = jax.random.normal(kw1, (dim, hidden), dtype=jnp.float32) * 0.1
    w2 = jax.random.normal(kw2, (hidden, dim1), dtype=jnp.float32) * 0.1

    # BatchNorm1d(dim * 25) parameters, eval mode (running stats), channel index = c*25 + j.
    gamma = 1.0 + 0.1 * jax.random.normal(kg, (dim * num_joints,), dtype=jnp.float32)
    beta = 0.1 * jax.random.normal(kb, (dim * num_joints,), dtype=jnp.float32)
    running_mean = 0.1 * jax.random.normal(km, (dim * num_joints,), dtype=jnp.float32)
    running_var = 1.0 + 0.1 * jax.random.uniform(kv, (dim * num_joints,), dtype=jnp.float32)

    inv_std = gamma / jnp.sqrt(running_var + eps)
    bn_scale_cj = inv_std.reshape(dim, num_joints)                         # (C, J)
    bn_shift_cj = (beta - running_mean * inv_std).reshape(dim, num_joints)

    out = embed_forward(x, bn_scale_cj, bn_shift_cj, w1, w2)
    out = jax.block_until_ready(out)

    ref = reference_forward(x, bn_scale_cj, bn_shift_cj, w1, w2)
    assert out.shape == (bs, dim1, num_joints, step), out.shape
    assert jnp.allclose(out, ref, atol=1e-4, rtol=1e-4), float(jnp.max(jnp.abs(out - ref)))

    print("KERNEL_OK")
</pallas_src>

<mosaic_0001>
module attributes {stable_mosaic.version = 11 : i64} {
  func.func @_embed_kernel(%arg0: i32, %arg1: memref<1x3x200xf32, #tpu.memory_space<vmem>>, %arg2: memref<3x200xf32, #tpu.memory_space<vmem>>, %arg3: memref<3x200xf32, #tpu.memory_space<vmem>>, %arg4: memref<64x3xf32, #tpu.memory_space<vmem>>, %arg5: memref<128x64xf32, #tpu.memory_space<vmem>>, %arg6: memref<1x128x200xf32, #tpu.memory_space<vmem>>) attributes {dimension_semantics = [#tpu.dimension_semantics<parallel>], iteration_bounds = array<i64: 2>, scalar_prefetch = 0 : i64, scratch_operands = 0 : i64, tpu.core_type = #tpu.core_type<tc>, window_params = [{transform_indices = @transform_0, window_bounds = array<i64: 1, 3, 200>}, {pipeline_mode = #tpu.pipeline_mode<synchronous>, transform_indices = @transform_1, window_bounds = array<i64: 3, 200>}, {pipeline_mode = #tpu.pipeline_mode<synchronous>, transform_indices = @transform_2, window_bounds = array<i64: 3, 200>}, {pipeline_mode = #tpu.pipeline_mode<synchronous>, transform_indices = @transform_3, window_bounds = array<i64: 64, 3>}, {pipeline_mode = #tpu.pipeline_mode<synchronous>, transform_indices = @transform_4, window_bounds = array<i64: 128, 64>}, {transform_indices = @transform_5, window_bounds = array<i64: 1, 128, 200>}]} {
    %c0 = arith.constant 0 : index
    %c0_0 = arith.constant 0 : index
    %c0_1 = arith.constant 0 : index
    %0 = vector.load %arg1[%c0, %c0_0, %c0_1] : memref<1x3x200xf32, #tpu.memory_space<vmem>>, vector<1x3x200xf32>
    %1 = vector.shape_cast %0 : vector<1x3x200xf32> to vector<3x200xf32>
    %c0_2 = arith.constant 0 : index
    %c0_3 = arith.constant 0 : index
    %2 = vector.load %arg2[%c0_2, %c0_3] : memref<3x200xf32, #tpu.memory_space<vmem>>, vector<3x200xf32>
    %3 = arith.mulf %1, %2 : vector<3x200xf32>
    %c0_4 = arith.constant 0 : index
    %c0_5 = arith.constant 0 : index
    %4 = vector.load %arg3[%c0_4, %c0_5] : memref<3x200xf32, #tpu.memory_space<vmem>>, vector<3x200xf32>
    %5 = arith.addf %3, %4 : vector<3x200xf32>
    %c0_6 = arith.constant 0 : index
    %c0_7 = arith.constant 0 : index
    %6 = vector.load %arg4[%c0_6, %c0_7] : memref<64x3xf32, #tpu.memory_space<vmem>>, vector<64x3xf32>
    %7 = vector.extract_strided_slice %6 {offsets = [0, 0], sizes = [64, 1], strides = [1, 1]} : vector<64x3xf32> to vector<64x1xf32>
    %8 = vector.extract_strided_slice %5 {offsets = [0, 0], sizes = [1, 200], strides = [1, 1]} : vector<3x200xf32> to vector<1x200xf32>
    %9 = vector.broadcast %7 : vector<64x1xf32> to vector<64x200xf32>
    %10 = vector.broadcast %8 : vector<1x200xf32> to vector<64x200xf32>
    %11 = arith.mulf %9, %10 : vector<64x200xf32>
    %12 = vector.extract_strided_slice %6 {offsets = [0, 1], sizes = [64, 1], strides = [1, 1]} : vector<64x3xf32> to vector<64x1xf32>
    %13 = vector.extract_strided_slice %5 {offsets = [1, 0], sizes = [1, 200], strides = [1, 1]} : vector<3x200xf32> to vector<1x200xf32>
    %14 = vector.broadcast %12 : vector<64x1xf32> to vector<64x200xf32>
    %15 = vector.broadcast %13 : vector<1x200xf32> to vector<64x200xf32>
    %16 = arith.mulf %14, %15 : vector<64x200xf32>
    %17 = arith.addf %11, %16 : vector<64x200xf32>
    %18 = vector.extract_strided_slice %6 {offsets = [0, 2], sizes = [64, 1], strides = [1, 1]} : vector<64x3xf32> to vector<64x1xf32>
    %19 = vector.extract_strided_slice %5 {offsets = [2, 0], sizes = [1, 200], strides = [1, 1]} : vector<3x200xf32> to vector<1x200xf32>
    %20 = vector.broadcast %18 : vector<64x1xf32> to vector<64x200xf32>
    %21 = vector.broadcast %19 : vector<1x200xf32> to vector<64x200xf32>
    %22 = arith.mulf %20, %21 : vector<64x200xf32>
    %23 = arith.addf %17, %22 : vector<64x200xf32>
    %cst = arith.constant 0.000000e+00 : f32
    %24 = vector.broadcast %cst : f32 to vector<64x200xf32>
    %25 = arith.maximumf %23, %24 : vector<64x200xf32>
    %c0_8 = arith.constant 0 : index
    %c0_9 = arith.constant 0 : index
    %26 = vector.load %arg5[%c0_8, %c0_9] : memref<128x64xf32, #tpu.memory_space<vmem>>, vector<128x64xf32>
    %cst_10 = arith.constant dense<0.000000e+00> : vector<128x200xf32>
    %27 = tpu.matmul %26, %25, %cst_10 {dimension_numbers = #tpu.dot_dimension_numbers<[1], [0], [0], [1], [0, 0, 1, 1], [], []>} : vector<128x64xf32>, vector<64x200xf32>, vector<128x200xf32> -> vector<128x200xf32>
    %cst_11 = arith.constant 0.000000e+00 : f32
    %28 = vector.broadcast %cst_11 : f32 to vector<128x200xf32>
    %29 = arith.maximumf %27, %28 : vector<128x200xf32>
    %c0_12 = arith.constant 0 : index
    %c0_13 = arith.constant 0 : index
    %c0_14 = arith.constant 0 : index
    %30 = vector.load %arg6[%c0_12, %c0_13, %c0_14] : memref<1x128x200xf32, #tpu.memory_space<vmem>>, vector<1x128x200xf32>
    %31 = vector.shape_cast %30 : vector<1x128x200xf32> to vector<128x200xf32>
    %32 = vector.shape_cast %29 : vector<128x200xf32> to vector<1x128x200xf32>
    tpu.vector_store %arg6[%c0_12, %c0_13, %c0_14], %32 {strides = array<i32>} : memref<1x128x200xf32, #tpu.memory_space<vmem>>, vector<1x128x200xf32>,
    return
  }
  func.func @transform_0(%arg0: i32) -> (i32, i32, i32) {
    %c0_i32 = arith.constant 0 : i32
    %c0_i32_0 = arith.constant 0 : i32
    %c0_i32_1 = arith.constant 0 : i32
    return %arg0, %c0_i32, %c0_i32_0 : i32, i32, i32
  }
  func.func @transform_1(%arg0: i32) -> (i32, i32) {
    %c0_i32 = arith.constant 0 : i32
    %c0_i32_0 = arith.constant 0 : i32
    %c0_i32_1 = arith.constant 0 : i32
    return %c0_i32, %c0_i32_0 : i32, i32
  }
  func.func @transform_2(%arg0: i32) -> (i32, i32) {
    %c0_i32 = arith.constant 0 : i32
    %c0_i32_0 = arith.constant 0 : i32
    %c0_i32_1 = arith.constant 0 : i32
    return %c0_i32, %c0_i32_0 : i32, i32
  }
  func.func @transform_3(%arg0: i32) -> (i32, i32) {
    %c0_i32 = arith.constant 0 : i32
    %c0_i32_0 = arith.constant 0 : i32
    %c0_i32_1 = arith.constant 0 : i32
    return %c0_i32, %c0_i32_0 : i32, i32
  }
  func.func @transform_4(%arg0: i32) -> (i32, i32) {
    %c0_i32 = arith.constant 0 : i32
    %c0_i32_0 = arith.constant 0 : i32
    %c0_i32_1 = arith.constant 0 : i32
    return %c0_i32, %c0_i32_0 : i32, i32
  }
  func.func @transform_5(%arg0: i32) -> (i32, i32, i32) {
    %c0_i32 = arith.constant 0 : i32
    %c0_i32_0 = arith.constant 0 : i32
    %c0_i32_1 = arith.constant 0 : i32
    return %arg0, %c0_i32, %c0_i32_0 : i32, i32, i32
  }
}

</mosaic_0001>

<llo_original>
// kernel: embed_forward.1
$region0: #{embed_forward.1}
  #allocation0 [shape = 'u32[]', space=smem, size = 0x4, offset = 0x4, fixed_abs, tag = 'smem constant byte address 0x4 - core index']
  #allocation1 [shape = 'u32[72,128]{1,0:T(1,128)}', space=vmem, size = 0x9000, scoped, tag = 'internal scratch']
  %s0 = inlined_call_operand.vmem [shape: f32[2,3,200], index: 0, kind: input, shape index: {}]
  %s1 = inlined_call_operand.vmem [shape: f32[3,200], index: 1, kind: input, shape index: {}]
  %s2 = inlined_call_operand.vmem [shape: f32[3,200], index: 2, kind: input, shape index: {}]
  %s3 = inlined_call_operand.vmem [shape: f32[64,3], index: 3, kind: input, shape index: {}]
  %s4 = inlined_call_operand.vmem [shape: f32[128,64], index: 4, kind: input, shape index: {}]
  %s5 = inlined_call_operand.vmem [shape: f32[2,128,200], index: 5, kind: output, shape index: {}]
  %s6 = sld [smem:[#allocation0]]
  $region53: #{embed_forward.1} parent=0
    _
  %s8 = ssub.s32 1, %s6
  %s9 = scalar_select 0, %s8, %s6
  loop: start=0, step=1, limit=4
  $region2: #{embed_forward.1} parent=0 // loop_pre_header
    _
  $region3: #{embed_forward.1} parent=0 // loop_header
    %s11 = sphi 0, %s15
    %p12 = scmp.ge.s32.totalorder %s11, 4
    %s21 = sphi 0, %s23
    %s24 = sphi 0, %s21
    %s25 = sphi 0, %s24
    %s41 = sphi 0, %s25
    %s45 = sphi 0, %s45
    %s47 = sphi 0, %s45
    %s48 = sphi 0, %s47
    %s62 = sphi 0, %s48
    %s66 = sphi 0, %s66
    %s68 = sphi 0, %s66
    %s69 = sphi 0, %s68
    %s83 = sphi 0, %s69
    %s87 = sphi 0, %s87
    %s89 = sphi 0, %s87
    %s90 = sphi 0, %s89
    %s104 = sphi 0, %s90
    %s108 = sphi 0, %s108
    %s110 = sphi 0, %s108
    %s111 = sphi 0, %s110
    %s125 = sphi 0, %s111
    %s131 = sphi 0, %s133
    %s134 = sphi 0, %s131
    %s135 = sphi 0, %s134
    %s151 = sphi 0, %s135
  $region4: #{embed_forward.1} parent=0 // loop_header_branch
    %14 = sbr.rel (%p12) target = $region8
  $region5: #{embed_forward.1} parent=0 // loop_body
    %s16 = ssub.s32 %s11, 1
    %s17 = ssub.s32 %s11, 2
    %s18 = sadd.s32 %s11, 1
    %s19 = ssub.s32 %s11, %s18
    %p20 = scmp.eq.s32.totalorder %s19, 0
    %s22 = sadd.s32 %s21, 1
    %s23 = scalar_select %p20, %s21, %s22
    %p26 = pneg %p20
    %p27 = scmp.eq.s32.totalorder %s11, 1
    %p28 = por %p26, %p27
    %p29 = scmp.ne.s32.totalorder %s21, %s24
    %p30 = scmp.eq.s32.totalorder %s11, 0
    %p31 = por %p29, %p30
    %p32 = scmp.ne.s32.totalorder %s21, %s24
    %p33 = scmp.eq.s32.totalorder %s16, 1
    %p34 = por %p32, %p33
    %p35 = scmp.ne.s32.totalorder %s24, %s25
    %p36 = scmp.eq.s32.totalorder %s16, 0
    %p37 = por %p35, %p36
    %p38 = scmp.ne.s32.totalorder %s24, %s25
    %p39 = scmp.eq.s32.totalorder %s17, 1
    %p40 = por %p38, %p39
    %p42 = scmp.ne.s32.totalorder %s25, %s41
    %p43 = scmp.eq.s32.totalorder %s17, 0
    %p44 = por %p42, %p43
    %s46 = sadd.s32 %s45, 1
    %p49 = scmp.eq.s32.totalorder %s11, 1
    %p50 = scmp.ne.s32.totalorder %s45, %s47
    %p51 = scmp.eq.s32.totalorder %s11, 0
    %p52 = por %p50, %p51
    %p53 = scmp.ne.s32.totalorder %s45, %s47
    %p54 = scmp.eq.s32.totalorder %s16, 1
    %p55 = por %p53, %p54
    %p56 = scmp.ne.s32.totalorder %s47, %s48
    %p57 = scmp.eq.s32.totalorder %s16, 0
    %p58 = por %p56, %p57
    %p59 = scmp.ne.s32.totalorder %s47, %s48
    %p60 = scmp.eq.s32.totalorder %s17, 1
    %p61 = por %p59, %p60
    %p63 = scmp.ne.s32.totalorder %s48, %s62
    %p64 = scmp.eq.s32.totalorder %s17, 0
    %p65 = por %p63, %p64
    %s67 = sadd.s32 %s66, 1
    %p70 = scmp.eq.s32.totalorder %s11, 1
    %p71 = scmp.ne.s32.totalorder %s66, %s68
    %p72 = scmp.eq.s32.totalorder %s11, 0
    %p73 = por %p71, %p72
    %p74 = scmp.ne.s32.totalorder %s66, %s68
    %p75 = scmp.eq.s32.totalorder %s16, 1
    %p76 = por %p74, %p75
    %p77 = scmp.ne.s32.totalorder %s68, %s69
    %p78 = scmp.eq.s32.totalorder %s16, 0
    %p79 = por %p77, %p78
    %p80 = scmp.ne.s32.totalorder %s68, %s69
    %p81 = scmp.eq.s32.totalorder %s17, 1
    %p82 = por %p80, %p81
    %p84 = scmp.ne.s32.totalorder %s69, %s83
    %p85 = scmp.eq.s32.totalorder %s17, 0
    %p86 = por %p84, %p85
    %s88 = sadd.s32 %s87, 1
    %p91 = scmp.eq.s32.totalorder %s11, 1
    %p92 = scmp.ne.s32.totalorder %s87, %s89
    %p93 = scmp.eq.s32.totalorder %s11, 0
    %p94 = por %p92, %p93
    %p95 = scmp.ne.s32.totalorder %s87, %s89
    %p96 = scmp.eq.s32.totalorder %s16, 1
    %p97 = por %p95, %p96
    %p98 = scmp.ne.s32.totalorder %s89, %s90
    %p99 = scmp.eq.s32.totalorder %s16, 0
    %p100 = por %p98, %p99
    %p101 = scmp.ne.s32.totalorder %s89, %s90
    %p102 = scmp.eq.s32.totalorder %s17, 1
    %p103 = por %p101, %p102
    %p105 = scmp.ne.s32.totalorder %s90, %s104
    %p106 = scmp.eq.s32.totalorder %s17, 0
    %p107 = por %p105, %p106
    %s109 = sadd.s32 %s108, 1
    %p112 = scmp.eq.s32.totalorder %s11, 1
    %p113 = scmp.ne.s32.totalorder %s108, %s110
    %p114 = scmp.eq.s32.totalorder %s11, 0
    %p115 = por %p113, %p114
    %p116 = scmp.ne.s32.totalorder %s108, %s110
    %p117 = scmp.eq.s32.totalorder %s16, 1
    %p118 = por %p116, %p117
    %p119 = scmp.ne.s32.totalorder %s110, %s111
    %p120 = scmp.eq.s32.totalorder %s16, 0
    %p121 = por %p119, %p120
    %p122 = scmp.ne.s32.totalorder %s110, %s111
    %p123 = scmp.eq.s32.totalorder %s17, 1
    %p124 = por %p122, %p123
    %p126 = scmp.ne.s32.totalorder %s111, %s125
    %p127 = scmp.eq.s32.totalorder %s17, 0
    %p128 = por %p126, %p127
    %s129 = ssub.s32 %s11, %s18
    %p130 = scmp.eq.s32.totalorder %s129, 0
    %s132 = sadd.s32 %s131, 1
    %s133 = scalar_select %p130, %s131, %s132
    %p136 = pneg %p130
    %p137 = scmp.eq.s32.totalorder %s11, 1
    %p138 = por %p136, %p137
    %p139 = scmp.ne.s32.totalorder %s131, %s134
    %p140 = scmp.eq.s32.totalorder %s11, 0
    %p141 = por %p139, %p140
    %p142 = scmp.ne.s32.totalorder %s131, %s134
    %p143 = scmp.eq.s32.totalorder %s16, 1
    %p144 = por %p142, %p143
    %p145 = scmp.ne.s32.totalorder %s134, %s135
    %p146 = scmp.eq.s32.totalorder %s16, 0
    %p147 = por %p145, %p146
    %p148 = scmp.ne.s32.totalorder %s134, %s135
    %p149 = scmp.eq.s32.totalorder %s17, 1
    %p150 = por %p148, %p149
    %p152 = scmp.ne.s32.totalorder %s135, %s151
    %p153 = scmp.eq.s32.totalorder %s17, 0
    %p154 = por %p152, %p153
    %p155 = scmp.le.s32.totalorder 1, %s11
    %p156 = scmp.lt.s32.totalorder %s11, 3
    %p157 = pnand %p155, %p156
    %p158 = pneg %p157
    // Predicated region
    $region9: #{embed_forward.1} parent=5 // pred_check
      _
    $region10: #{embed_forward.1} parent=5 // pred_check_branch
      %160 = sbr.rel (%p157) target = $region12
    $region11: #{embed_forward.1} parent=5 // pred_region
      %s161 = ssub.s32 %s11, 1
      // Predicated region
      $region13: #{embed_forward.1} parent=11 // pred_check
        %p162 = pneg %p58
      $region14: #{embed_forward.1} parent=11 // pred_check_branch
        %164 = sbr.rel (%p162) target = $region16
      $region15: #{embed_forward.1} parent=11 // pred_region
        _
      $region16: #{embed_forward.1} parent=11 // pred_fallthru
        _
      // Predicated region
      $region17: #{embed_forward.1} parent=11 // pred_check
        %p165 = pneg %p79
      $region18: #{embed_forward.1} parent=11 // pred_check_branch
        %167 = sbr.rel (%p165) target = $region20
      $region19: #{embed_forward.1} parent=11 // pred_region
        _
      $region20: #{embed_forward.1} parent=11 // pred_fallthru
        _
      // Predicated region
      $region21: #{embed_forward.1} parent=11 // pred_check
        %p168 = pneg %p100
      $region22: #{embed_forward.1} parent=11 // pred_check_branch
        %170 = sbr.rel (%p168) target = $region24
      $region23: #{embed_forward.1} parent=11 // pred_region
        _
      $region24: #{embed_forward.1} parent=11 // pred_fallthru
        _
      // Predicated region
      $region25: #{embed_forward.1} parent=11 // pred_check
        %p171 = pneg %p121
      $region26: #{embed_forward.1} parent=11 // pred_check_branch
        %173 = sbr.rel (%p171) target = $region28
      $region27: #{embed_forward.1} parent=11 // pred_region
        _
      $region28: #{embed_forward.1} parent=11 // pred_fallthru
        _
    $region12: #{embed_forward.1} parent=5 // pred_fallthru
      _
    %p174 = scmp.lt.s32.totalorder %s11, 2
    // Predicated region
    $region29: #{embed_forward.1} parent=5 // pred_check
      %p175 = pneg %p174
    $region30: #{embed_forward.1} parent=5 // pred_check_branch
      %177 = sbr.rel (%p175) target = $region32
    $region31: #{embed_forward.1} parent=5 // pred_region
      // Predicated region
      $region33: #{embed_forward.1} parent=31 // pred_check
        %p178 = pneg %p31
      $region34: #{embed_forward.1} parent=31 // pred_check_branch
        %180 = sbr.rel (%p178) target = $region36
      $region35: #{embed_forward.1} parent=31 // pred_region
        %p181 = scmp.lt.s32.totalorder %s11, 1
        %s182 = scalar_select %p181, %s11, 1
        %s183 = smul.addr %s182, 2
        %s184 = smul.addr %s183, 4
        %s185 = scalar_lea.vmem %s0, %s184
      $region36: #{embed_forward.1} parent=31 // pred_fallthru
        _
    $region32: #{embed_forward.1} parent=5 // pred_fallthru
      _
    %p186 = scmp.le.s32.totalorder 1, %s11
    %p187 = scmp.lt.s32.totalorder %s11, 3
    %p188 = pnand %p186, %p187
    %p189 = pneg %p188
    // Predicated region
    $region37: #{embed_forward.1} parent=5 // pred_check
      _
    $region38: #{embed_forward.1} parent=5 // pred_check_branch
      %191 = sbr.rel (%p188) target = $region40
    $region39: #{embed_forward.1} parent=5 // pred_region
      %s192 = ssub.s32 %s11, 1
      %p193 = scmp.lt.s32.totalorder %s16, 1
      %s194 = scalar_select %p193, %s16, 1
      %s195 = smul.addr %s194, 2
      %s196 = smul.addr %s195, 4
      %s197 = scalar_lea.vmem %s0, %s196
      %p198 = pneg %p37
      %p199 = pneg %p34
      %p200 = pneg %p58
      %p201 = pneg %p55
      %p202 = pneg %p79
      %p203 = pneg %p76
      %p204 = pneg %p100
      %p205 = pneg %p97
      %p206 = pneg %p121
      %p207 = pneg %p118
      %p208 = pneg %p147
      %p209 = pneg %p144
      %p210 = scmp.lt.s32.totalorder %s16, 1
      %s211 = scalar_select %p210, %s16, 1
      %s212 = smul.addr %s211, 32
      %s213 = smul.addr %s212, 8
      %s214 = scalar_lea.vmem %s5, %s213
      %p215 = scmp.lt.s32.totalorder %s16, 1
      %s216 = scalar_select %p215, %s16, 1
      %s217 = smul.addr %s216, 2
      %s218 = smul.addr %s217, 4
      %s219 = scalar_lea.vmem %s0, %s218
      %p220 = scmp.lt.s32.totalorder %s16, 1
      %s221 = scalar_select %p220, %s16, 1
      %s222 = smul.addr %s221, 32
      %s223 = smul.addr %s222, 8
      %s224 = scalar_lea.vmem %s5, %s223
      %v225 = vld [vmem:[%s219] sm:$0x77]
      %v226 = vld [vmem:[%s1] sm:$0x77]
      %v227 = vmul.f32 %v225, %v226
      %v228 = vld [vmem:[%s2] sm:$0x77]
      %v229 = vadd.f32 %v227, %v228
      %v230 = vld [vmem:[%s3] sm:$0xff]
      %v231 = vld [vmem:[%s3 + $0x8] sm:$0xff]
      %v232 = vld [vmem:[%s3 + $0x10] sm:$0xff]
      %v233 = vld [vmem:[%s3 + $0x18] sm:$0xff]
      %v234 = vld [vmem:[%s3 + $0x20] sm:$0xff]
      %v235 = vld [vmem:[%s3 + $0x28] sm:$0xff]
      %v236 = vld [vmem:[%s3 + $0x30] sm:$0xff]
      %v237 = vld [vmem:[%s3 + $0x38] sm:$0xff]
      %239 = vset.pattern.permute.xlu0 0
      %240 = vperm.xlu0 %239, %v230
      %v241 = vpop.permute.xlu0 %240
      %244 = vset.pattern.permute.xlu0 0
      %245 = vperm.xlu0 %244, %v231
      %v246 = vpop.permute.xlu0 %245
      %249 = vset.pattern.permute.xlu0 0
      %250 = vperm.xlu0 %249, %v232
      %v251 = vpop.permute.xlu0 %250
      %254 = vset.pattern.permute.xlu0 0
      %255 = vperm.xlu0 %254, %v233
      %v256 = vpop.permute.xlu0 %255
      %259 = vset.pattern.permute.xlu0 0
      %260 = vperm.xlu0 %259, %v234
      %v261 = vpop.permute.xlu0 %260
      %264 = vset.pattern.permute.xlu0 0
      %265 = vperm.xlu0 %264, %v235
      %v266 = vpop.permute.xlu0 %265
      %269 = vset.pattern.permute.xlu0 0
      %270 = vperm.xlu0 %269, %v236
      %v271 = vpop.permute.xlu0 %270
      %274 = vset.pattern.permute.xlu0 0
      %275 = vperm.xlu0 %274, %v237
      %v276 = vpop.permute.xlu0 %275
      %v279 = vperm.slane %v229, 0
      %v280 = vperm.slane %v229, 4
      %v283 = vperm.slane %v279, 0
      %v284 = vperm.slane %v280, 0
      %v285 = vmul.f32 %v241, %v283
      %v286 = vmul.f32 %v241, %v284
      %v287 = vmul.f32 %v246, %v283
      %v288 = vmul.f32 %v246, %v284
      %v289 = vmul.f32 %v251, %v283
      %v290 = vmul.f32 %v251, %v284
      %v291 = vmul.f32 %v256, %v283
      %v292 = vmul.f32 %v256, %v284
      %v293 = vmul.f32 %v261, %v283
      %v294 = vmul.f32 %v261, %v284
      %v295 = vmul.f32 %v266, %v283
      %v296 = vmul.f32 %v266, %v284
      %v297 = vmul.f32 %v271, %v283
      %v298 = vmul.f32 %v271, %v284
      %v299 = vmul.f32 %v276, %v283
      %v300 = vmul.f32 %v276, %v284
      %301 = vset.pattern.permute.xlu0 1
      %302 = vperm.xlu0 %301, %v230
      %v303 = vpop.permute.xlu0 %302
      %305 = vset.pattern.permute.xlu0 1
      %306 = vperm.xlu0 %305, %v231
      %v307 = vpop.permute.xlu0 %306
      %309 = vset.pattern.permute.xlu0 1
      %310 = vperm.xlu0 %309, %v232
      %v311 = vpop.permute.xlu0 %310
      %313 = vset.pattern.permute.xlu0 1
      %314 = vperm.xlu0 %313, %v233
      %v315 = vpop.permute.xlu0 %314
      %317 = vset.pattern.permute.xlu0 1
      %318 = vperm.xlu0 %317, %v234
      %v319 = vpop.permute.xlu0 %318
      %321 = vset.pattern.permute.xlu0 1
      %322 = vperm.xlu0 %321, %v235
      %v323 = vpop.permute.xlu0 %322
      %325 = vset.pattern.permute.xlu0 1
      %326 = vperm.xlu0 %325, %v236
      %v327 = vpop.permute.xlu0 %326
      %329 = vset.pattern.permute.xlu0 1
      %330 = vperm.xlu0 %329, %v237
      %v331 = vpop.permute.xlu0 %330
      %v333 = vperm.slane %v229, 1
      %v334 = vperm.slane %v229, 5
      %v337 = vperm.slane %v333, 1
      %v338 = vperm.slane %v334, 1
      %v339 = vmul.f32 %v303, %v337
      %v340 = vmul.f32 %v303, %v338
      %v341 = vmul.f32 %v307, %v337
      %v342 = vmul.f32 %v307, %v338
      %v343 = vmul.f32 %v311, %v337
      %v344 = vmul.f32 %v311, %v338
      %v345 = vmul.f32 %v315, %v337
      %v346 = vmul.f32 %v315, %v338
      %v347 = vmul.f32 %v319, %v337
      %v348 = vmul.f32 %v319, %v338
      %v349 = vmul.f32 %v323, %v337
      %v350 = vmul.f32 %v323, %v338
      %v351 = vmul.f32 %v327, %v337
      %v352 = vmul.f32 %v327, %v338
      %v353 = vmul.f32 %v331, %v337
      %v354 = vmul.f32 %v331, %v338
      %v355 = vadd.f32 %v285, %v339
      %v356 = vadd.f32 %v286, %v340
      %v357 = vadd.f32 %v287, %v341
      %v358 = vadd.f32 %v288, %v342
      %v359 = vadd.f32 %v289, %v343
      %v360 = vadd.f32 %v290, %v344
      %v361 = vadd.f32 %v291, %v345
      %v362 = vadd.f32 %v292, %v346
      %v363 = vadd.f32 %v293, %v347
      %v364 = vadd.f32 %v294, %v348
      %v365 = vadd.f32 %v295, %v349
      %v366 = vadd.f32 %v296, %v350
      %v367 = vadd.f32 %v297, %v351
      %v368 = vadd.f32 %v298, %v352
      %v369 = vadd.f32 %v299, %v353
      %v370 = vadd.f32 %v300, %v354
      %371 = vset.pattern.permute.xlu0 2
      %372 = vperm.xlu0 %371, %v230
      %v373 = vpop.permute.xlu0 %372
      %375 = vset.pattern.permute.xlu0 2
      %376 = vperm.xlu0 %375, %v231
      %v377 = vpop.permute.xlu0 %376
      %379 = vset.pattern.permute.xlu0 2
      %380 = vperm.xlu0 %379, %v232
      %v381 = vpop.permute.xlu0 %380
      %383 = vset.pattern.permute.xlu0 2
      %384 = vperm.xlu0 %383, %v233
      %v385 = vpop.permute.xlu0 %384
      %387 = vset.pattern.permute.xlu0 2
      %388 = vperm.xlu0 %387, %v234
      %v389 = vpop.permute.xlu0 %388
      %391 = vset.pattern.permute.xlu0 2
      %392 = vperm.xlu0 %391, %v235
      %v393 = vpop.permute.xlu0 %392
      %395 = vset.pattern.permute.xlu0 2
      %396 = vperm.xlu0 %395, %v236
      %v397 = vpop.permute.xlu0 %396
      %399 = vset.pattern.permute.xlu0 2
      %400 = vperm.xlu0 %399, %v237
      %v401 = vpop.permute.xlu0 %400
      %v403 = vperm.slane %v229, 2
      %v404 = vperm.slane %v229, 6
      %v407 = vperm.slane %v403, 2
      %v408 = vperm.slane %v404, 2
      %v409 = vmul.f32 %v373, %v407
      %v410 = vmul.f32 %v373, %v408
      %v411 = vmul.f32 %v377, %v407
      %v412 = vmul.f32 %v377, %v408
      %v413 = vmul.f32 %v381, %v407
      %v414 = vmul.f32 %v381, %v408
      %v415 = vmul.f32 %v385, %v407
      %v416 = vmul.f32 %v385, %v408
      %v417 = vmul.f32 %v389, %v407
      %v418 = vmul.f32 %v389, %v408
      %v419 = vmul.f32 %v393, %v407
      %v420 = vmul.f32 %v393, %v408
      %v421 = vmul.f32 %v397, %v407
      %v422 = vmul.f32 %v397, %v408
      %v423 = vmul.f32 %v401, %v407
      %v424 = vmul.f32 %v401, %v408
      %v425 = vadd.f32 %v355, %v409
      %v426 = vadd.f32 %v356, %v410
      %v427 = vadd.f32 %v357, %v411
      %v428 = vadd.f32 %v358, %v412
      %v429 = vadd.f32 %v359, %v413
      %v430 = vadd.f32 %v360, %v414
      %v431 = vadd.f32 %v361, %v415
      %v432 = vadd.f32 %v362, %v416
      %v433 = vadd.f32 %v363, %v417
      %v434 = vadd.f32 %v364, %v418
      %v435 = vadd.f32 %v365, %v419
      %v436 = vadd.f32 %v366, %v420
      %v437 = vadd.f32 %v367, %v421
      %v438 = vadd.f32 %v368, %v422
      %v439 = vadd.f32 %v369, %v423
      %v440 = vadd.f32 %v370, %v424
      %v441 = vmax.f32 %v425, 0.0
      %v442 = vmax.f32 %v426, 0.0
      %v443 = vmax.f32 %v427, 0.0
      %v444 = vmax.f32 %v428, 0.0
      %v445 = vmax.f32 %v429, 0.0
      %v446 = vmax.f32 %v430, 0.0
      %v447 = vmax.f32 %v431, 0.0
      %v448 = vmax.f32 %v432, 0.0
      %v449 = vmax.f32 %v433, 0.0
      %v450 = vmax.f32 %v434, 0.0
      %v451 = vmax.f32 %v435, 0.0
      %v452 = vmax.f32 %v436, 0.0
      %v453 = vmax.f32 %v437, 0.0
      %v454 = vmax.f32 %v438, 0.0
      %v455 = vmax.f32 %v439, 0.0
      %v456 = vmax.f32 %v440, 0.0
      %v457 = vld [vmem:[%s4] sm:$0xff]
      %v458 = vld [vmem:[%s4 + $0x8] sm:$0xff]
      %v459 = vld [vmem:[%s4 + $0x10] sm:$0xff]
      %v460 = vld [vmem:[%s4 + $0x18] sm:$0xff]
      %v461 = vld [vmem:[%s4 + $0x20] sm:$0xff]
      %v462 = vld [vmem:[%s4 + $0x28] sm:$0xff]
      %v463 = vld [vmem:[%s4 + $0x30] sm:$0xff]
      %v464 = vld [vmem:[%s4 + $0x38] sm:$0xff]
      %v465 = vld [vmem:[%s4 + $0x40] sm:$0xff]
      %v466 = vld [vmem:[%s4 + $0x48] sm:$0xff]
      %v467 = vld [vmem:[%s4 + $0x50] sm:$0xff]
      %v468 = vld [vmem:[%s4 + $0x58] sm:$0xff]
      %v469 = vld [vmem:[%s4 + $0x60] sm:$0xff]
      %v470 = vld [vmem:[%s4 + $0x68] sm:$0xff]
      %v471 = vld [vmem:[%s4 + $0x70] sm:$0xff]
      %v472 = vld [vmem:[%s4 + $0x78] sm:$0xff]
      %vm473 = vcmask 523264
      %v475 = vsel %vm473, %v457, 0
      %v478 = vsel %vm473, %v458, 0
      %v481 = vsel %vm473, %v459, 0
      %v484 = vsel %vm473, %v460, 0
      %v487 = vsel %vm473, %v461, 0
      %v490 = vsel %vm473, %v462, 0
      %v493 = vsel %vm473, %v463, 0
      %v496 = vsel %vm473, %v464, 0
      %v499 = vsel %vm473, %v465, 0
      %v502 = vsel %vm473, %v466, 0
      %v505 = vsel %vm473, %v467, 0
      %v508 = vsel %vm473, %v468, 0
      %v511 = vsel %vm473, %v469, 0
      %v514 = vsel %vm473, %v470, 0
      %v517 = vsel %vm473, %v471, 0
      %v520 = vsel %vm473, %v472, 0
      %522 = vmatpush.msra.mxu0 0.0
      %523 = vmatpush.msra.mxu0 0.0
      %524 = vmatpush.msra.mxu0 0.0
      %525 = vmatpush.msra.mxu0 0.0
      %526 = vmatpush.msra.mxu0 0.0
      %527 = vmatpush.msra.mxu0 0.0
      %528 = vmatpush.msra.mxu0 0.0
      %529 = vmatpush.msra.mxu0 0.0
      %530 = vmatpush.msra.mxu0 %v455
      %531 = vmatpush.msra.mxu0 %v453
      %532 = vmatpush.msra.mxu0 %v451
      %533 = vmatpush.msra.mxu0 %v449
      %534 = vmatpush.msra.mxu0 %v447
      %535 = vmatpush.msra.mxu0 %v445
      %536 = vmatpush.msra.mxu0 %v443
      %537 = vmatpush.msra.mxu0 %v441
      %538 = vmatmul.f32.gmra.mxu0 %v475
      %v539 = vpop.f32.mrf.mxu0
      %v540 = vadd.f32 0.0, %v539
      %541 = vmatmul.f32.gmra.mxu0 %v478
      %v542 = vpop.f32.mrf.mxu0
      %v543 = vadd.f32 0.0, %v542
      %544 = vmatmul.f32.gmra.mxu0 %v481
      %v545 = vpop.f32.mrf.mxu0
      %v546 = vadd.f32 0.0, %v545
      %547 = vmatmul.f32.gmra.mxu0 %v484
      %v548 = vpop.f32.mrf.mxu0
      %v549 = vadd.f32 0.0, %v548
      %550 = vmatmul.f32.gmra.mxu0 %v487
      %v551 = vpop.f32.mrf.mxu0
      %v552 = vadd.f32 0.0, %v551
      %553 = vmatmul.f32.gmra.mxu0 %v490
      %v554 = vpop.f32.mrf.mxu0
      %v555 = vadd.f32 0.0, %v554
      %556 = vmatmul.f32.gmra.mxu0 %v493
      %v557 = vpop.f32.mrf.mxu0
      %v558 = vadd.f32 0.0, %v557
      %559 = vmatmul.f32.gmra.mxu0 %v496
      %v560 = vpop.f32.mrf.mxu0
      %v561 = vadd.f32 0.0, %v560
      %562 = vmatmul.f32.gmra.mxu0 %v499
      %v563 = vpop.f32.mrf.mxu0
      %v564 = vadd.f32 0.0, %v563
      %565 = vmatmul.f32.gmra.mxu0 %v502
      %v566 = vpop.f32.mrf.mxu0
      %v567 = vadd.f32 0.0, %v566
      %568 = vmatmul.f32.gmra.mxu0 %v505
      %v569 = vpop.f32.mrf.mxu0
      %v570 = vadd.f32 0.0, %v569
      %571 = vmatmul.f32.gmra.mxu0 %v508
      %v572 = vpop.f32.mrf.mxu0
      %v573 = vadd.f32 0.0, %v572
      %574 = vmatmul.f32.gmra.mxu0 %v511
      %v575 = vpop.f32.mrf.mxu0
      %v576 = vadd.f32 0.0, %v575
      %577 = vmatmul.f32.gmra.mxu0 %v514
      %v578 = vpop.f32.mrf.mxu0
      %v579 = vadd.f32 0.0, %v578
      %580 = vmatmul.f32.gmra.mxu0 %v517
      %v581 = vpop.f32.mrf.mxu0
      %v582 = vadd.f32 0.0, %v581
      %583 = vmatmul.f32.gmra.mxu0 %v520
      %v584 = vpop.f32.mrf.mxu0
      %v585 = vadd.f32 0.0, %v584
      %586 = vdwg.mxu0
      %587 = vmatpush.msra.mxu0 0.0
      %588 = vmatpush.msra.mxu0 0.0
      %589 = vmatpush.msra.mxu0 0.0
      %590 = vmatpush.msra.mxu0 0.0
      %591 = vmatpush.msra.mxu0 0.0
      %592 = vmatpush.msra.mxu0 0.0
      %593 = vmatpush.msra.mxu0 0.0
      %594 = vmatpush.msra.mxu0 0.0
      %595 = vmatpush.msra.mxu0 %v456
      %596 = vmatpush.msra.mxu0 %v454
      %597 = vmatpush.msra.mxu0 %v452
      %598 = vmatpush.msra.mxu0 %v450
      %599 = vmatpush.msra.mxu0 %v448
      %600 = vmatpush.msra.mxu0 %v446
      %601 = vmatpush.msra.mxu0 %v444
      %602 = vmatpush.msra.mxu0 %v442
      %603 = vmatmul.f32.gmra.mxu0 %v475
      %v604 = vpop.f32.mrf.mxu0
      %v605 = vadd.f32 0.0, %v604
      %606 = vmatmul.f32.gmra.mxu0 %v478
      %v607 = vpop.f32.mrf.mxu0
      %v608 = vadd.f32 0.0, %v607
      %609 = vmatmul.f32.gmra.mxu0 %v481
      %v610 = vpop.f32.mrf.mxu0
      %v611 = vadd.f32 0.0, %v610
      %612 = vmatmul.f32.gmra.mxu0 %v484
      %v613 = vpop.f32.mrf.mxu0
      %v614 = vadd.f32 0.0, %v613
      %615 = vmatmul.f32.gmra.mxu0 %v487
      %v616 = vpop.f32.mrf.mxu0
      %v617 = vadd.f32 0.0, %v616
      %618 = vmatmul.f32.gmra.mxu0 %v490
      %v619 = vpop.f32.mrf.mxu0
      %v620 = vadd.f32 0.0, %v619
      %621 = vmatmul.f32.gmra.mxu0 %v493
      %v622 = vpop.f32.mrf.mxu0
      %v623 = vadd.f32 0.0, %v622
      %624 = vmatmul.f32.gmra.mxu0 %v496
      %v625 = vpop.f32.mrf.mxu0
      %v626 = vadd.f32 0.0, %v625
      %627 = vmatmul.f32.gmra.mxu0 %v499
      %v628 = vpop.f32.mrf.mxu0
      %v629 = vadd.f32 0.0, %v628
      %630 = vmatmul.f32.gmra.mxu0 %v502
      %v631 = vpop.f32.mrf.mxu0
      %v632 = vadd.f32 0.0, %v631
      %633 = vmatmul.f32.gmra.mxu0 %v505
      %v634 = vpop.f32.mrf.mxu0
      %v635 = vadd.f32 0.0, %v634
      %636 = vmatmul.f32.gmra.mxu0 %v508
      %v637 = vpop.f32.mrf.mxu0
      %v638 = vadd.f32 0.0, %v637
      %639 = vmatmul.f32.gmra.mxu0 %v511
      %v640 = vpop.f32.mrf.mxu0
      %v641 = vadd.f32 0.0, %v640
      %642 = vmatmul.f32.gmra.mxu0 %v514
      %v643 = vpop.f32.mrf.mxu0
      %v644 = vadd.f32 0.0, %v643
      %645 = vmatmul.f32.gmra.mxu0 %v517
      %v646 = vpop.f32.mrf.mxu0
      %v647 = vadd.f32 0.0, %v646
      %648 = vmatmul.f32.gmra.mxu0 %v520
      %v649 = vpop.f32.mrf.mxu0
      %v650 = vadd.f32 0.0, %v649
      %651 = vdwg.mxu0
      %v652 = vmax.f32 %v540, 0.0
      %v653 = vmax.f32 %v605, 0.0
      %v654 = vmax.f32 %v543, 0.0
      %v655 = vmax.f32 %v608, 0.0
      %v656 = vmax.f32 %v546, 0.0
      %v657 = vmax.f32 %v611, 0.0
      %v658 = vmax.f32 %v549, 0.0
      %v659 = vmax.f32 %v614, 0.0
      %v660 = vmax.f32 %v552, 0.0
      %v661 = vmax.f32 %v617, 0.0
      %v662 = vmax.f32 %v555, 0.0
      %v663 = vmax.f32 %v620, 0.0
      %v664 = vmax.f32 %v558, 0.0
      %v665 = vmax.f32 %v623, 0.0
      %v666 = vmax.f32 %v561, 0.0
      %v667 = vmax.f32 %v626, 0.0
      %v668 = vmax.f32 %v564, 0.0
      %v669 = vmax.f32 %v629, 0.0
      %v670 = vmax.f32 %v567, 0.0
      %v671 = vmax.f32 %v632, 0.0
      %v672 = vmax.f32 %v570, 0.0
      %v673 = vmax.f32 %v635, 0.0
      %v674 = vmax.f32 %v573, 0.0
      %v675 = vmax.f32 %v638, 0.0
      %v676 = vmax.f32 %v576, 0.0
      %v677 = vmax.f32 %v641, 0.0
      %v678 = vmax.f32 %v579, 0.0
      %v679 = vmax.f32 %v644, 0.0
      %v680 = vmax.f32 %v582, 0.0
      %v681 = vmax.f32 %v647, 0.0
      %v682 = vmax.f32 %v585, 0.0
      %v683 = vmax.f32 %v650, 0.0
      %684 = vst [vmem:[%s224] sm:$0xff] %v652
      %vm685 = vcmask 588800
      %686 = vst.msk [vmem:[%s224 + $0x8] sm:$0xff] %vm685, %v653
      %687 = vst [vmem:[%s224 + $0x10] sm:$0xff] %v654
      %688 = vst.msk [vmem:[%s224 + $0x18] sm:$0xff] %vm685, %v655
      %689 = vst [vmem:[%s224 + $0x20] sm:$0xff] %v656
      %690 = vst.msk [vmem:[%s224 + $0x28] sm:$0xff] %vm685, %v657
      %691 = vst [vmem:[%s224 + $0x30] sm:$0xff] %v658
      %692 = vst.msk [vmem:[%s224 + $0x38] sm:$0xff] %vm685, %v659
      %693 = vst [vmem:[%s224 + $0x40] sm:$0xff] %v660
      %694 = vst.msk [vmem:[%s224 + $0x48] sm:$0xff] %vm685, %v661
      %695 = vst [vmem:[%s224 + $0x50] sm:$0xff] %v662
      %696 = vst.msk [vmem:[%s224 + $0x58] sm:$0xff] %vm685, %v663
      %697 = vst [vmem:[%s224 + $0x60] sm:$0xff] %v664
      %698 = vst.msk [vmem:[%s224 + $0x68] sm:$0xff] %vm685, %v665
      %699 = vst [vmem:[%s224 + $0x70] sm:$0xff] %v666
      %700 = vst.msk [vmem:[%s224 + $0x78] sm:$0xff] %vm685, %v667
      %701 = vst [vmem:[%s224 + $0x80] sm:$0xff] %v668
      %702 = vst.msk [vmem:[%s224 + $0x88] sm:$0xff] %vm685, %v669
      %703 = vst [vmem:[%s224 + $0x90] sm:$0xff] %v670
      %704 = vst.msk [vmem:[%s224 + $0x98] sm:$0xff] %vm685, %v671
      %705 = vst [vmem:[%s224 + $0xa0] sm:$0xff] %v672
      %706 = vst.msk [vmem:[%s224 + $0xa8] sm:$0xff] %vm685, %v673
      %707 = vst [vmem:[%s224 + $0xb0] sm:$0xff] %v674
      %708 = vst.msk [vmem:[%s224 + $0xb8] sm:$0xff] %vm685, %v675
      %709 = vst [vmem:[%s224 + $0xc0] sm:$0xff] %v676
      %710 = vst.msk [vmem:[%s224 + $0xc8] sm:$0xff] %vm685, %v677
      %711 = vst [vmem:[%s224 + $0xd0] sm:$0xff] %v678
      %712 = vst.msk [vmem:[%s224 + $0xd8] sm:$0xff] %vm685, %v679
      %713 = vst [vmem:[%s224 + $0xe0] sm:$0xff] %v680
      %714 = vst.msk [vmem:[%s224 + $0xe8] sm:$0xff] %vm685, %v681
      %715 = vst [vmem:[%s224 + $0xf0] sm:$0xff] %v682
      %716 = vst.msk [vmem:[%s224 + $0xf8] sm:$0xff] %vm685, %v683
      %p717 = scmp.lt.s32.totalorder %s16, 1
      %s718 = scalar_select %p717, %s16, 1
      %s719 = smul.addr %s718, 32
      %s720 = smul.addr %s719, 8
      %s721 = scalar_lea.vmem %s5, %s720
      // Predicated region
      $region41: #{embed_forward.1} parent=39 // pred_check
        %p722 = pneg %p144
      $region42: #{embed_forward.1} parent=39 // pred_check_branch
        %724 = sbr.rel (%p722) target = $region44
      $region43: #{embed_forward.1} parent=39 // pred_region
        _
      $region44: #{embed_forward.1} parent=39 // pred_fallthru
        _
    $region40: #{embed_forward.1} parent=5 // pred_fallthru
      _
    %p725 = scmp.le.s32.totalorder 2, %s11
    // Predicated region
    $region45: #{embed_forward.1} parent=5 // pred_check
      %p726 = pneg %p725
    $region46: #{embed_forward.1} parent=5 // pred_check_branch
      %728 = sbr.rel (%p726) target = $region48
    $region47: #{embed_forward.1} parent=5 // pred_region
      %s729 = ssub.s32 %s11, 2
      // Predicated region
      $region49: #{embed_forward.1} parent=47 // pred_check
        %p730 = pneg %p150
      $region50: #{embed_forward.1} parent=47 // pred_check_branch
        %732 = sbr.rel (%p730) target = $region52
      $region51: #{embed_forward.1} parent=47 // pred_region
        %p733 = scmp.lt.s32.totalorder %s17, 1
        %s734 = scalar_select %p733, %s17, 1
        %s735 = smul.addr %s734, 32
        %s736 = smul.addr %s735, 8
        %s737 = scalar_lea.vmem %s5, %s736
      $region52: #{embed_forward.1} parent=47 // pred_fallthru
        _
    $region48: #{embed_forward.1} parent=5 // pred_fallthru
      _
  $region6: #{embed_forward.1} parent=0 // loop_footer
    %s15 = sadd.s32 1, %s11
  $region7: #{embed_forward.1} parent=0 // loop_footer_branch
    %10 = sbr.rel target = $region3
  $region8: #{embed_forward.1} parent=0 // loop_exit
    _

</llo_original>
